<compile_context>
chip_gen: v6e
topology: v6e:2x2x1
jax: 0.10.0
libtpu: 0.0.40
codegen_flags: <defaults>
</compile_context>

<pallas_src>
import jax
import jax.numpy as jnp
import numpy as np
from jax.experimental import pallas as pl
from jax.experimental.pallas import tpu as pltpu


def _round_up(x, m):
    return ((x + m - 1) // m) * m


# ----------------------------------------------------------------------------
# Kernels
# ----------------------------------------------------------------------------
def _rwf_kernel_single_k(x_ref, w_ref, sb_ref, o_ref):
    # Whole reduction fits in one K tile: no accumulator, no branches.
    acc = jnp.dot(x_ref[...], w_ref[...], preferred_element_type=jnp.float32)
    o_ref[...] = acc * sb_ref[0:1, :] + sb_ref[1:2, :]


def _rwf_kernel_multi_k(x_ref, w_ref, sb_ref, o_ref):
    # grid = (M tiles, N tiles, K tiles); K (reduction) is the last axis.
    # o_ref is f32 and resident across K -> accumulate directly into it.
    k = pl.program_id(2)

    @pl.when(k == 0)
    def _():
        o_ref[...] = jnp.zeros_like(o_ref)

    o_ref[...] += jnp.dot(x_ref[...], w_ref[...],
                          preferred_element_type=jnp.float32)

    @pl.when(k == pl.num_programs(2) - 1)
    def _():
        # Output-side per-channel scale + bias (lane-dense [2, tn] block).
        o_ref[...] = o_ref[...] * sb_ref[0:1, :] + sb_ref[1:2, :]


# ----------------------------------------------------------------------------
# Tile selection
# ----------------------------------------------------------------------------
def _choose_tiles(B, K, N, *, tm_max=256, tn_max=512, tk_max=1024,
                  operand_dtype=jnp.float32):
    sub = 16 if operand_dtype == jnp.bfloat16 else 8
    tm_cap = 512 if B >= 512 else tm_max           # bigger M tiles for big batch
    tm = min(tm_cap, _round_up(B, sub))
    tn = min(tn_max, _round_up(N, 128))
    tk = min(tk_max, _round_up(K, 128))
    Mp = _round_up(B, tm)
    Np = _round_up(N, tn)
    Kp = _round_up(K, tk)
    # v7x megacore: if the parallel (M, N) grid would be a single tile, split N
    # in two so both TensorCores get work (only when N is wide enough).
    if (Mp // tm == 1) and (Np // tn == 1) and _round_up(N, 128) >= 256:
        tn = _round_up(_round_up(N, 128) // 2, 128)
        Np = 2 * tn
    return tm, tn, tk, Mp, Np, Kp


# ----------------------------------------------------------------------------
# One-time parameter preparation (hoisted out of the forward path)
# ----------------------------------------------------------------------------
def prepare_rwf_params(v_weights, s_weights, bias, *, batch_hint=128,
                       use_bf16_operands=False,
                       tm_max=256, tn_max=512, tk_max=1024):
    """Pre-transpose v_weights to [K, N], pad to tile multiples, and pack the
    per-channel scale & bias into one lane-dense [2, Np] array.  Do this ONCE
    per set of parameters and reuse the result for every forward call."""
    N, K = v_weights.shape
    op_dtype = jnp.bfloat16 if use_bf16_operands else jnp.float32
    _, tn, tk, _, Np, Kp = _choose_tiles(batch_hint, K, N, tm_max=tm_max,
                                         tn_max=tn_max, tk_max=tk_max,
                                         operand_dtype=op_dtype)
    w_t = v_weights.astype(jnp.float32).T                      # [K, N]
    if (Kp, Np) != (K, N):
        w_t = jnp.zeros((Kp, Np), jnp.float32).at[:K, :N].set(w_t)
    w_t = w_t.astype(op_dtype)

    sb = jnp.zeros((2, Np), jnp.float32)
    sb = sb.at[0, :N].set(s_weights.astype(jnp.float32))        # row 0: scale
    sb = sb.at[1, :N].set(bias.astype(jnp.float32))             # row 1: bias

    return {"w_t": w_t, "sb": sb, "size_in": K, "size_out": N,
            "tn": tn, "tk": tk, "Np": Np, "Kp": Kp, "op_dtype": op_dtype}


# ----------------------------------------------------------------------------
# Forward
# ----------------------------------------------------------------------------
def linear_layer_rwf(x, params):
    """x: [B, size_in] -> [B, size_out] (f32), using pre-prepared params."""
    B, K = x.shape
    assert K == params["size_in"]
    N = params["size_out"]
    tn, tk = params["tn"], params["tk"]
    Np, Kp = params["Np"], params["Kp"]
    op_dtype = params["op_dtype"]

    sub = 16 if op_dtype == jnp.bfloat16 else 8
    tm_cap = 512 if B >= 512 else 256
    tm = min(tm_cap, _round_up(B, sub))
    Mp = _round_up(B, tm)

    # Only pad the activations when genuinely needed (K pad is required for
    # correctness of the reduction; M pad keeps stores unmasked).
    x_p = x.astype(op_dtype)
    if (Mp, Kp) != (B, K):
        x_p = jnp.zeros((Mp, Kp), op_dtype).at[:B, :K].set(x_p)

    n_k = Kp // tk
    grid_mn = (Mp // tm, Np // tn)

    if n_k == 1:
        out = pl.pallas_call(
            _rwf_kernel_single_k,
            out_shape=jax.ShapeDtypeStruct((Mp, Np), jnp.float32),
            grid_spec=pltpu.PrefetchScalarGridSpec(
                num_scalar_prefetch=0,
                grid=grid_mn,
                in_specs=[
                    pl.BlockSpec((tm, tk), lambda i, j: (i, 0)),   # x tile
                    pl.BlockSpec((tk, tn), lambda i, j: (0, j)),   # w (= v.T) tile
                    pl.BlockSpec((2, tn), lambda i, j: (0, j)),    # [scale; bias]
                ],
                out_specs=pl.BlockSpec((tm, tn), lambda i, j: (i, j)),
            ),
            compiler_params=pltpu.CompilerParams(
                dimension_semantics=("parallel", "parallel"),
                vmem_limit_bytes=48 * 1024 * 1024,
            ),
        )(x_p, params["w_t"], params["sb"])
    else:
        out = pl.pallas_call(
            _rwf_kernel_multi_k,
            out_shape=jax.ShapeDtypeStruct((Mp, Np), jnp.float32),
            grid_spec=pltpu.PrefetchScalarGridSpec(
                num_scalar_prefetch=0,
                grid=grid_mn + (n_k,),
                in_specs=[
                    pl.BlockSpec((tm, tk), lambda i, j, k: (i, k)),   # x tile
                    pl.BlockSpec((tk, tn), lambda i, j, k: (k, j)),   # w (= v.T) tile
                    pl.BlockSpec((2, tn), lambda i, j, k: (0, j)),    # [scale; bias]
                ],
                out_specs=pl.BlockSpec((tm, tn), lambda i, j, k: (i, j)),
            ),
            compiler_params=pltpu.CompilerParams(
                dimension_semantics=("parallel", "parallel", "arbitrary"),
                vmem_limit_bytes=48 * 1024 * 1024,
            ),
        )(x_p, params["w_t"], params["sb"])

    if (Mp, Np) != (B, N):
        out = out[:B, :N]
    return out


# ----------------------------------------------------------------------------
# Parameter init mimicking LinearLayerRWF.__init__ (deterministic, JAX-side)
# ----------------------------------------------------------------------------
def init_params(key, size_in, size_out, mean, std):
    kw, ks = jax.random.split(key)
    bound = float(np.sqrt(6.0 / size_in))  # kaiming_uniform_ (a=0) on (out, in)
    w = jax.random.uniform(kw, (size_out, size_in), jnp.float32, -bound, bound)
    s = jax.random.normal(ks, (size_out,), jnp.float32) * std + mean
    s = jnp.exp(s)
    v = w / s[:, None]
    bias = jnp.zeros((size_out,), jnp.float32)
    return v, s, bias


if __name__ == "__main__":
    key = jax.random.PRNGKey(0)

    # ---- Test 1: tiny shape (single-K fast path, M/K/N padding exercised) ----
    size_in, size_out, batch = 32, 16, 8
    k1, k2, key = jax.random.split(key, 3)
    x = jax.random.normal(k1, (batch, size_in), jnp.float32)
    v_w, s_w, b = init_params(k2, size_in, size_out, mean=0.0, std=0.1)

    params = prepare_rwf_params(v_w, s_w, b, batch_hint=batch)   # hoisted, once
    out = jax.block_until_ready(linear_layer_rwf(x, params))

    ref = jnp.matmul(x, (v_w * s_w[:, None]).T,
                     precision=jax.lax.Precision.HIGHEST) + b
    np.testing.assert_allclose(np.asarray(out), np.asarray(ref),
                               rtol=1e-5, atol=1e-5)

    # ---- Test 2: multi-K reduction path with accumulate-into-o_ref ----------
    # Small K/N but tile maxima forced down so the K grid has 2 steps and the
    # aligned fast-paths (no x pad, no output slice) are also exercised.
    size_in, size_out, batch = 256, 384, 40
    k1, k2, key = jax.random.split(key, 3)
    x2 = jax.random.normal(k1, (batch, size_in), jnp.float32)
    v_w2, s_w2, b2 = init_params(k2, size_in, size_out, mean=0.0, std=0.1)

    params2 = prepare_rwf_params(v_w2, s_w2, b2, batch_hint=batch,
                                 tn_max=128, tk_max=128)
    out2 = jax.block_until_ready(linear_layer_rwf(x2, params2))

    ref2 = jnp.matmul(x2, (v_w2 * s_w2[:, None]).T,
                      precision=jax.lax.Precision.HIGHEST) + b2
    np.testing.assert_allclose(np.asarray(out2), np.asarray(ref2),
                               rtol=5e-5, atol=5e-5)

    print("KERNEL_OK")
</pallas_src>

<mosaic_0001>
module attributes {stable_mosaic.version = 11 : i64} {
  func.func @_rwf_kernel_single_k(%arg0: i32, %arg1: i32, %arg2: memref<8x128xf32, #tpu.memory_space<vmem>>, %arg3: memref<128x128xf32, #tpu.memory_space<vmem>>, %arg4: memref<2x128xf32, #tpu.memory_space<vmem>>, %arg5: memref<8x128xf32, #tpu.memory_space<vmem>>) attributes {dimension_semantics = [#tpu.dimension_semantics<parallel>, #tpu.dimension_semantics<parallel>], iteration_bounds = array<i64: 1, 1>, scalar_prefetch = 0 : i64, scratch_operands = 0 : i64, tpu.core_type = #tpu.core_type<tc>, window_params = [{transform_indices = @transform_0, window_bounds = array<i64: 8, 128>}, {transform_indices = @transform_1, window_bounds = array<i64: 128, 128>}, {transform_indices = @transform_2, window_bounds = array<i64: 2, 128>}, {transform_indices = @transform_3, window_bounds = array<i64: 8, 128>}]} {
    %c0 = arith.constant 0 : index
    %c0_0 = arith.constant 0 : index
    %0 = vector.load %arg2[%c0, %c0_0] : memref<8x128xf32, #tpu.memory_space<vmem>>, vector<8x128xf32>
    %c0_1 = arith.constant 0 : index
    %c0_2 = arith.constant 0 : index
    %1 = vector.load %arg3[%c0_1, %c0_2] : memref<128x128xf32, #tpu.memory_space<vmem>>, vector<128x128xf32>
    %cst = arith.constant dense<0.000000e+00> : vector<8x128xf32>
    %2 = tpu.matmul %0, %1, %cst {dimension_numbers = #tpu.dot_dimension_numbers<[1], [0], [0], [1], [0, 0, 1, 1], [], []>} : vector<8x128xf32>, vector<128x128xf32>, vector<8x128xf32> -> vector<8x128xf32>
    %c0_3 = arith.constant 0 : index
    %c0_4 = arith.constant 0 : index
    %3 = vector.load %arg4[%c0_3, %c0_4] : memref<2x128xf32, #tpu.memory_space<vmem>>, vector<1x128xf32>
    %4 = vector.broadcast %3 : vector<1x128xf32> to vector<8x128xf32>
    %5 = arith.mulf %2, %4 : vector<8x128xf32>
    %c1 = arith.constant 1 : index
    %c0_5 = arith.constant 0 : index
    %6 = vector.load %arg4[%c1, %c0_5] : memref<2x128xf32, #tpu.memory_space<vmem>>, vector<1x128xf32>
    %7 = vector.broadcast %6 : vector<1x128xf32> to vector<8x128xf32>
    %8 = arith.addf %5, %7 : vector<8x128xf32>
    %c0_6 = arith.constant 0 : index
    %c0_7 = arith.constant 0 : index
    %9 = vector.load %arg5[%c0_6, %c0_7] : memref<8x128xf32, #tpu.memory_space<vmem>>, vector<8x128xf32>
    tpu.vector_store %arg5[%c0_6, %c0_7], %8 {strides = array<i32>} : memref<8x128xf32, #tpu.memory_space<vmem>>, vector<8x128xf32>,
    return
  }
  func.func @transform_0(%arg0: i32, %arg1: i32) -> (i32, i32) {
    %c0_i32 = arith.constant 0 : i32
    %c0_i32_0 = arith.constant 0 : i32
    return %arg0, %c0_i32 : i32, i32
  }
  func.func @transform_1(%arg0: i32, %arg1: i32) -> (i32, i32) {
    %c0_i32 = arith.constant 0 : i32
    %c0_i32_0 = arith.constant 0 : i32
    return %c0_i32, %arg1 : i32, i32
  }
  func.func @transform_2(%arg0: i32, %arg1: i32) -> (i32, i32) {
    %c0_i32 = arith.constant 0 : i32
    %c0_i32_0 = arith.constant 0 : i32
    return %c0_i32, %arg1 : i32, i32
  }
  func.func @transform_3(%arg0: i32, %arg1: i32) -> (i32, i32) {
    %c0_i32 = arith.constant 0 : i32
    return %arg0, %arg1 : i32, i32
  }
}

</mosaic_0001>

<llo_original>
// kernel: tpu_custom_call.1
$region0: #{tpu_custom_call.1}
  #allocation0 [shape = 'u32[]', space=smem, size = 0x4, offset = 0x4, fixed_abs, tag = 'smem constant byte address 0x4 - core index']
  #allocation1 [shape = 'u32[144,128]{1,0:T(1,128)}', space=vmem, size = 0x12000, scoped, tag = 'internal scratch']
  %s0 = inlined_call_operand.hbm [shape: f32[8,128], index: 0, kind: input, shape index: {}]
  %s1 = inlined_call_operand.hbm [shape: f32[128,128], index: 1, kind: input, shape index: {}]
  %s2 = inlined_call_operand.vmem [shape: f32[2,128], index: 2, kind: input, shape index: {}]
  %s3 = inlined_call_operand.hbm [shape: f32[8,128], index: 3, kind: output, shape index: {}]
  %s4 = sld [smem:[#allocation0]]
  $region30: #{tpu_custom_call.1} parent=0
    _
  %s6 = ssub.s32 1, %s4
  %s7 = scalar_select 0, %s6, %s4
  $region1: #{tpu_custom_call.1} parent=0
    #allocation2 [shape = 'u8[4096]{0}', space=vmem, size = 0x1000, scoped, tag = 'input window, operand 0, single buffered']
    #allocation3 [shape = 's32[1]{0}', space=sflag, size = 0x4, scoped, tag = 'scoped memory for tpu_custom_call.1']
    #allocation4 [shape = 's32[1]{0}', space=sflag, size = 0x4, scoped, tag = 'scoped memory for tpu_custom_call.1']
    #allocation5 [shape = 'u8[65536]{0}', space=vmem, size = 0x10000, scoped, tag = 'input window, operand 1, single buffered']
    #allocation6 [shape = 's32[1]{0}', space=sflag, size = 0x4, scoped, tag = 'scoped memory for tpu_custom_call.1']
    #allocation7 [shape = 'u8[4096]{0}', space=vmem, size = 0x1000, scoped, tag = 'output window, operand 0, single buffered']
    %8 = vsyncpa [#allocation3], 0
    %9 = vsyncpa [#allocation6], 0
    %10 = vsyncpa [#allocation4], 0
    // Predicated region
    $region2: #{tpu_custom_call.1} parent=1 // pred_check
      _
    $region3: #{tpu_custom_call.1} parent=1 // pred_check_branch
      %12 = sbr.rel (0) target = $region5
    $region4: #{tpu_custom_call.1} parent=1 // pred_region
      %s14 = ssub.s32 128, 128
      %15 = vsyncadd [#allocation3], %s14
      %s17 = sshll.u32 [#allocation2], 4
      %s18 = int_to_ptr.vmem [resolvable:$true] %s17
      %20 = dma.hbm_to_vmem [thread:$0]  %s0, 128, %s18, [#allocation3]
    $region5: #{tpu_custom_call.1} parent=1 // pred_fallthru
      _
    // Predicated region
    $region6: #{tpu_custom_call.1} parent=1 // pred_check
      _
    $region7: #{tpu_custom_call.1} parent=1 // pred_check_branch
      %22 = sbr.rel (0) target = $region9
    $region8: #{tpu_custom_call.1} parent=1 // pred_region
      %s24 = ssub.s32 2048, 2048
      %25 = vsyncadd [#allocation6], %s24
      %s26 = sshll.u32 [#allocation5], 4
      %s27 = int_to_ptr.vmem [resolvable:$true] %s26
      %32 = dma.hbm_to_vmem [thread:$0]  %s1, 2048, %s27, [#allocation6], 128, 128, 8
    $region9: #{tpu_custom_call.1} parent=1 // pred_fallthru
      _
    // Predicated region
    $region10: #{tpu_custom_call.1} parent=1 // pred_check
      _
    $region11: #{tpu_custom_call.1} parent=1 // pred_check_branch
      %34 = sbr.rel (0) target = $region13
    $region12: #{tpu_custom_call.1} parent=1 // pred_region
      _
    $region13: #{tpu_custom_call.1} parent=1 // pred_fallthru
      _
    // Predicated region
    $region14: #{tpu_custom_call.1} parent=1 // pred_check
      _
    $region15: #{tpu_custom_call.1} parent=1 // pred_check_branch
      %36 = sbr.rel (0) target = $region17
    $region16: #{tpu_custom_call.1} parent=1 // pred_region
      %37 = dma.done [#allocation3], 128
    $region17: #{tpu_custom_call.1} parent=1 // pred_fallthru
      _
    // Predicated region
    $region18: #{tpu_custom_call.1} parent=1 // pred_check
      _
    $region19: #{tpu_custom_call.1} parent=1 // pred_check_branch
      %39 = sbr.rel (0) target = $region21
    $region20: #{tpu_custom_call.1} parent=1 // pred_region
      %40 = dma.done [#allocation6], 2048
    $region21: #{tpu_custom_call.1} parent=1 // pred_fallthru
      _
    %v41 = vld [vmem:[#allocation2] sm:$0xff]
    %v42 = vld [vmem:[#allocation5] sm:$0xff]
    %v43 = vld [vmem:[#allocation5 + $0x8] sm:$0xff]
    %v44 = vld [vmem:[#allocation5 + $0x10] sm:$0xff]
    %v45 = vld [vmem:[#allocation5 + $0x18] sm:$0xff]
    %v46 = vld [vmem:[#allocation5 + $0x20] sm:$0xff]
    %v47 = vld [vmem:[#allocation5 + $0x28] sm:$0xff]
    %v48 = vld [vmem:[#allocation5 + $0x30] sm:$0xff]
    %v49 = vld [vmem:[#allocation5 + $0x38] sm:$0xff]
    %v50 = vld [vmem:[#allocation5 + $0x40] sm:$0xff]
    %v51 = vld [vmem:[#allocation5 + $0x48] sm:$0xff]
    %v52 = vld [vmem:[#allocation5 + $0x50] sm:$0xff]
    %v53 = vld [vmem:[#allocation5 + $0x58] sm:$0xff]
    %v54 = vld [vmem:[#allocation5 + $0x60] sm:$0xff]
    %v55 = vld [vmem:[#allocation5 + $0x68] sm:$0xff]
    %v56 = vld [vmem:[#allocation5 + $0x70] sm:$0xff]
    %v57 = vld [vmem:[#allocation5 + $0x78] sm:$0xff]
    %58 = vmatprep.subr.mxu0 0.0
    %59 = vmatpush1.msra.mxu0 %v57
    %60 = vmatprep.subr.mxu0 0.0
    %61 = vmatpush1.msra.mxu0 %v56
    %62 = vmatprep.subr.mxu0 0.0
    %63 = vmatpush1.msra.mxu0 %v55
    %64 = vmatprep.subr.mxu0 0.0
    %65 = vmatpush1.msra.mxu0 %v54
    %66 = vmatprep.subr.mxu0 0.0
    %67 = vmatpush1.msra.mxu0 %v53
    %68 = vmatprep.subr.mxu0 0.0
    %69 = vmatpush1.msra.mxu0 %v52
    %70 = vmatprep.subr.mxu0 0.0
    %71 = vmatpush1.msra.mxu0 %v51
    %72 = vmatprep.subr.mxu0 0.0
    %73 = vmatpush1.msra.mxu0 %v50
    %74 = vmatprep.subr.mxu0 0.0
    %75 = vmatpush1.msra.mxu0 %v49
    %76 = vmatprep.subr.mxu0 0.0
    %77 = vmatpush1.msra.mxu0 %v48
    %78 = vmatprep.subr.mxu0 0.0
    %79 = vmatpush1.msra.mxu0 %v47
    %80 = vmatprep.subr.mxu0 0.0
    %81 = vmatpush1.msra.mxu0 %v46
    %82 = vmatprep.subr.mxu0 0.0
    %83 = vmatpush1.msra.mxu0 %v45
    %84 = vmatprep.subr.mxu0 0.0
    %85 = vmatpush1.msra.mxu0 %v44
    %86 = vmatprep.subr.mxu0 0.0
    %87 = vmatpush1.msra.mxu0 %v43
    %88 = vmatprep.subr.mxu0 0.0
    %89 = vmatpush1.msra.mxu0 %v42
    %90 = vmatprep.subr.mxu0 0.0
    %91 = vmatpush2.msra.mxu0 0.0
    %92 = vmatprep.subr.mxu0 0.0
    %93 = vmatpush2.msra.mxu0 0.0
    %94 = vmatprep.subr.mxu0 0.0
    %95 = vmatpush2.msra.mxu0 0.0
    %96 = vmatprep.subr.mxu0 0.0
    %97 = vmatpush2.msra.mxu0 0.0
    %98 = vmatprep.subr.mxu0 0.0
    %99 = vmatpush2.msra.mxu0 0.0
    %100 = vmatprep.subr.mxu0 0.0
    %101 = vmatpush2.msra.mxu0 0.0
    %102 = vmatprep.subr.mxu0 0.0
    %103 = vmatpush2.msra.mxu0 0.0
    %104 = vmatprep.subr.mxu0 0.0
    %105 = vmatpush2.msra.mxu0 0.0
    %106 = vmatprep.subr.mxu0 0.0
    %107 = vmatpush2.msra.mxu0 0.0
    %108 = vmatprep.subr.mxu0 0.0
    %109 = vmatpush2.msra.mxu0 0.0
    %110 = vmatprep.subr.mxu0 0.0
    %111 = vmatpush2.msra.mxu0 0.0
    %112 = vmatprep.subr.mxu0 0.0
    %113 = vmatpush2.msra.mxu0 0.0
    %114 = vmatprep.subr.mxu0 0.0
    %115 = vmatpush2.msra.mxu0 0.0
    %116 = vmatprep.subr.mxu0 0.0
    %117 = vmatpush2.msra.mxu0 0.0
    %118 = vmatprep.subr.mxu0 0.0
    %119 = vmatpush2.msra.mxu0 0.0
    %120 = vmatprep.subr.mxu0 0.0
    %121 = vmatpush2.msra.mxu0 0.0
    %122 = vmatprep.mubr.f32.mxu0 0.0
    %123 = vmatmul.mubr.f32.gmra.mxu0 %v41
    %v124 = vpop.f32.mrf.mxu0
    %v125 = vadd.f32 0.0, %v124
    %v126 = vpop.f32.mrf.mxu0
    %127 = vdwg.mxu0
    %v128 = vld [vmem:[%s2] sm:$0x1]
    %v129 = vlaneseq
    %v130 = vshrl.u32 %v129, 7
    %v131 = vsub.s32 0, %v130
    %v132 = vrot.slane %v128, %v131
    %v133 = vmul.f32 %v125, %v132
    %v134 = vld [vmem:[%s2 + $0x1] sm:$0x1]
    %v135 = vlaneseq
    %v136 = vshrl.u32 %v135, 7
    %v137 = vsub.s32 0, %v136
    %v138 = vrot.slane %v134, %v137
    %v139 = vadd.f32 %v133, %v138
    %140 = vst [vmem:[#allocation7] sm:$0xff] %v139
    // Predicated region
    $region22: #{tpu_custom_call.1} parent=1 // pred_check
      _
    $region23: #{tpu_custom_call.1} parent=1 // pred_check_branch
      %142 = sbr.rel (0) target = $region25
    $region24: #{tpu_custom_call.1} parent=1 // pred_region
      %s144 = ssub.s32 128, 128
      %145 = vsyncadd [#allocation4], %s144
      %s147 = sshll.u32 [#allocation7], 4
      %s148 = int_to_ptr.vmem [resolvable:$true] %s147
      %150 = dma.vmem_to_hbm [thread:$0]  %s148, 128, %s3, [#allocation4]
    $region25: #{tpu_custom_call.1} parent=1 // pred_fallthru
      _
    // Predicated region
    $region26: #{tpu_custom_call.1} parent=1 // pred_check
      _
    $region27: #{tpu_custom_call.1} parent=1 // pred_check_branch
      %152 = sbr.rel (0) target = $region29
    $region28: #{tpu_custom_call.1} parent=1 // pred_region
      %153 = dma.done [#allocation4], 128
    $region29: #{tpu_custom_call.1} parent=1 // pred_fallthru
      _
    %154 = vsyncpa [#allocation3], 1
    %155 = vsyncpa [#allocation6], 1
    %156 = vsyncpa [#allocation4], 1

</llo_original>
